<compile_context>
chip_gen: v7x
topology: tpu7x:2x2x1
jax: 0.10.0
libtpu: 0.0.40
codegen_flags: <defaults>
</compile_context>

<pallas_src>
import jax
import jax.numpy as jnp
from jax import lax
from jax.experimental import pallas as pl
from jax.experimental.pallas import tpu as pltpu

FC1_OUT = 257
FC1_PAD = 384  # next multiple of 128 (lane-dense head)


# --------------------------------------------------------------------------
# Kernel
# --------------------------------------------------------------------------
def lstm_head_kernel(tok_ref,    # (T*B, 1) int32, time-major rows: row = t*B + b
                     lstm_ref,   # (V + 2H, 8H) bf16: rows 0:V   = token->gates table
                                 #                    rows V:V+2H = blockdiag(Whh_f, Whh_b)
                     w1_ref,     # (2H, 384) bf16: fc1 weight for feat = [h_f | h_b]
                     misc_ref,   # (3, 384) f32: row0 = b1(pad), row1 = w2(pad), row2 = [b2, 0..]
                     state_ref,  # (2B, 2H) f32: rows 0:B = [h0_f|h0_b], rows B:2B = [c0_f|c0_b]
                     out_ref):   # (B, 1) f32
    TB = tok_ref.shape[0]
    B = state_ref.shape[0] // 2
    H = state_ref.shape[1] // 2
    T = TB // B
    V = lstm_ref.shape[0] - 2 * H
    H3 = 3 * H
    H4 = 4 * H

    # Static views into the packed bf16 LSTM slab (free .at-style ref slices).
    table = lstm_ref[0:V, :]                       # (V, 8H)
    whh_bd = lstm_ref[V:V + 2 * H, :]              # (2H, 8H) blockdiag(Whh_f, Whh_b)
    whh_f = lstm_ref[V:V + H, 0:H4]                # (H, 4H)  forward recurrent weight

    # ---- fused embedding + both input projections: a single MXU pass -------
    tok = tok_ref[...]                                                  # (TB, 1)
    onehot = (lax.broadcasted_iota(jnp.int32, (TB, V), 1) == tok
              ).astype(jnp.bfloat16)                                    # (TB, V)
    xg = jnp.dot(onehot, table, preferred_element_type=jnp.float32)     # (TB, 8H)

    # Pre-extract per-step forward gate inputs (static slices, independent of
    # the recurrence -> scheduler keeps them off the serial chain).
    xg_f = [xg[t * B:(t + 1) * B, 0:H4] for t in range(T)]              # T x (B, 4H)
    xg_b = xg[(T - 1) * B:TB, H4:2 * H4]                                # (B, 4H)

    # Initial states (already laid out lane-concatenated, no in-kernel concat).
    h0_fb = state_ref[0:B, :]                                           # (B, 2H)
    c0_f = state_ref[B:2 * B, 0:H]                                      # (B, H)
    c0_b = state_ref[B:2 * B, H:2 * H]                                  # (B, H)

    def activate(gates, c):
        # Gate order [i, f, o, g]: one sigmoid over 3H lanes, one tanh over H.
        sig = jax.nn.sigmoid(gates[:, 0:H3])
        g = jnp.tanh(gates[:, H3:H4])
        i = sig[:, 0:H]
        f = sig[:, H:2 * H]
        o = sig[:, 2 * H:H3]
        c_new = f * c + i * g
        h_new = o * jnp.tanh(c_new)
        return h_new, c_new

    # ---- step 0: forward step-0 and backward cell share ONE MXU pass -------
    xg0 = jnp.concatenate([xg_f[0], xg_b], axis=-1)                     # (B, 8H)
    gates0 = xg0 + jnp.dot(h0_fb.astype(jnp.bfloat16), whh_bd,
                           preferred_element_type=jnp.float32)          # (B, 8H)
    h_f, c_f = activate(gates0[:, 0:H4], c0_f)       # forward step t = 0
    h_b, _ = activate(gates0[:, H4:2 * H4], c0_b)    # backward (single) step

    # ---- forward recurrence t = 1 .. T-1, fully unrolled --------------------
    # NOTE: bf16 cast of h before the Whh matmul compounds rounding over T=8
    # steps; the 5e-2 tolerance below is chosen to accommodate bf16 MXU ops.
    for t in range(1, T):
        gates = xg_f[t] + jnp.dot(h_f.astype(jnp.bfloat16), whh_f,
                                  preferred_element_type=jnp.float32)
        h_f, c_f = activate(gates, c_f)

    # ---- head: one fused fc1 dot + ReLU; fc2 as a lane reduction ------------
    # TODO(synk): nn.Dropout is identity here (inference mode).
    feat = jnp.concatenate([h_f, h_b], axis=-1).astype(jnp.bfloat16)    # (B, 2H)
    z1 = (jnp.dot(feat, w1_ref[...], preferred_element_type=jnp.float32)
          + misc_ref[0:1, :])                                           # (B, 384)
    z1 = jnp.maximum(z1, 0.0)
    z2 = jnp.sum(z1 * misc_ref[1:2, :], axis=-1, keepdims=True) + misc_ref[2:3, 0:1]
    out_ref[...] = jax.nn.sigmoid(z2)                                   # (B, 1)


# --------------------------------------------------------------------------
# Parameter handling (PyTorch layout -> packed kernel slabs)
# --------------------------------------------------------------------------
def _reorder_ifgo_to_ifog(w):
    """PyTorch packs LSTM gates [i, f, g, o] along dim 0; kernel wants
    [i, f, o, g] so one sigmoid covers the first three gate blocks."""
    i, f, g, o = jnp.split(w, 4, axis=0)
    return jnp.concatenate([i, f, o, g], axis=0)


def prepare_kernel_params(raw):
    H = raw["whh_f"].shape[1]
    emb = raw["embedding"].astype(jnp.float32)            # (V, H) ; LSTM D == H here

    def lstm_dir(wih, whh, bih, bhh):
        wih_k = _reorder_ifgo_to_ifog(wih).T               # (D, 4H) f32
        whh_k = _reorder_ifgo_to_ifog(whh).T               # (H, 4H) f32
        b_k = _reorder_ifgo_to_ifog((bih + bhh)[:, None]).T  # (1, 4H)
        return wih_k, whh_k, b_k

    wih_f, whh_f, b_f = lstm_dir(raw["wih_f"], raw["whh_f"], raw["bih_f"], raw["bhh_f"])
    wih_b, whh_b, b_b = lstm_dir(raw["wih_b"], raw["whh_b"], raw["bih_b"], raw["bhh_b"])

    # Token -> gate-projection lookup table (biases folded in; one-hot rows sum to 1).
    table_f = emb @ wih_f + b_f                            # (V, 4H)
    table_b = emb @ wih_b + b_b                            # (V, 4H)
    table = jnp.concatenate([table_f, table_b], axis=-1)   # (V, 8H)

    # Block-diagonal recurrent weight: [h_f | h_b] @ blockdiag = [h_f@Whh_f | h_b@Whh_b].
    whh_bd = jnp.zeros((2 * H, 8 * H), jnp.float32)
    whh_bd = whh_bd.at[0:H, 0:4 * H].set(whh_f)
    whh_bd = whh_bd.at[H:2 * H, 4 * H:8 * H].set(whh_b)

    lstm_slab = jnp.concatenate([table, whh_bd], axis=0).astype(jnp.bfloat16)  # (V+2H, 8H)

    # Head: fc1 weight for feat = [h_f | h_b]; 257-wide output padded to 384 lanes.
    pad = FC1_PAD - FC1_OUT
    w1_slab = jnp.pad(raw["fc1_w"].T, ((0, 0), (0, pad))).astype(jnp.bfloat16)  # (2H, 384)
    b1 = jnp.pad(raw["fc1_b"], (0, pad))
    w2 = jnp.pad(raw["fc2_w"][0], (0, pad))
    b2_row = jnp.zeros((FC1_PAD,), jnp.float32).at[0].set(raw["fc2_b"][0])
    misc = jnp.stack([b1, w2, b2_row], axis=0).astype(jnp.float32)              # (3, 384)

    return {"lstm": lstm_slab, "w1": w1_slab, "misc": misc}


@jax.jit
def model_forward(tokens, kp, h0, c0):
    """tokens: (B, T) int32.  h0/c0: (2, B, H) f32 (xavier-normal initial state,
    sampled per forward like the PyTorch module does)."""
    B, T = tokens.shape
    tok_tm = jnp.transpose(tokens, (1, 0)).reshape(T * B, 1).astype(jnp.int32)

    # State slab: rows 0:B = [h0_f | h0_b], rows B:2B = [c0_f | c0_b].
    state = jnp.concatenate(
        [jnp.concatenate([h0[0], h0[1]], axis=-1),
         jnp.concatenate([c0[0], c0[1]], axis=-1)], axis=0).astype(jnp.float32)

    vmem = pl.BlockSpec(memory_space=pltpu.MemorySpace.VMEM)
    return pl.pallas_call(
        lstm_head_kernel,
        out_shape=jax.ShapeDtypeStruct((B, 1), jnp.float32),
        in_specs=[vmem] * 5,
        out_specs=vmem,
    )(tok_tm, kp["lstm"], kp["w1"], kp["misc"], state)


# --------------------------------------------------------------------------
# Pure-JAX f32 reference (PyTorch layout / gate order) for a correctness check
# --------------------------------------------------------------------------
def reference_forward(tokens, raw, h0, c0):
    emb = raw["embedding"][tokens]                                   # (B, T, H)
    B, T, H = emb.shape

    def cell(x_t, h, c, wih, whh, bih, bhh):
        gates = x_t @ wih.T + h @ whh.T + bih + bhh
        i = jax.nn.sigmoid(gates[:, 0 * H:1 * H])
        f = jax.nn.sigmoid(gates[:, 1 * H:2 * H])
        g = jnp.tanh(gates[:, 2 * H:3 * H])
        o = jax.nn.sigmoid(gates[:, 3 * H:4 * H])
        c_new = f * c + i * g
        return o * jnp.tanh(c_new), c_new

    h_f, c_f = h0[0], c0[0]
    for t in range(T):
        h_f, c_f = cell(emb[:, t], h_f, c_f,
                        raw["wih_f"], raw["whh_f"], raw["bih_f"], raw["bhh_f"])
    h_b, _ = cell(emb[:, T - 1], h0[1], c0[1],
                  raw["wih_b"], raw["whh_b"], raw["bih_b"], raw["bhh_b"])
    feat = jnp.concatenate([h_f, h_b], axis=-1)
    z1 = jnp.maximum(feat @ raw["fc1_w"].T + raw["fc1_b"], 0.0)
    z2 = z1 @ raw["fc2_w"].T + raw["fc2_b"]
    return jax.nn.sigmoid(z2)


def init_params(key, embedding_dim, hidden_dim):
    """PyTorch-layout parameters (gate order [i, f, g, o], weight_ih: (4H, D))."""
    V = embedding_dim             # nn.Embedding(embedding_dim, hidden_dim)
    D = embedding_dim             # LSTM input_size == embedding_dim
    H = hidden_dim
    ks = jax.random.split(key, 16)
    k_lstm = 1.0 / jnp.sqrt(jnp.float32(H))
    k_fc1 = 1.0 / jnp.sqrt(jnp.float32(2 * H))
    k_fc2 = 1.0 / jnp.sqrt(jnp.float32(FC1_OUT))

    def u(k, shape, bound):
        return jax.random.uniform(k, shape, jnp.float32, -bound, bound)

    return {
        "embedding": jax.random.normal(ks[0], (V, H), jnp.float32),
        # forward direction
        "wih_f": u(ks[1], (4 * H, D), k_lstm),
        "whh_f": u(ks[2], (4 * H, H), k_lstm),
        "bih_f": u(ks[3], (4 * H,), k_lstm),
        "bhh_f": u(ks[4], (4 * H,), k_lstm),
        # backward direction
        "wih_b": u(ks[5], (4 * H, D), k_lstm),
        "whh_b": u(ks[6], (4 * H, H), k_lstm),
        "bih_b": u(ks[7], (4 * H,), k_lstm),
        "bhh_b": u(ks[8], (4 * H,), k_lstm),
        # head
        "fc1_w": u(ks[9], (FC1_OUT, 2 * H), k_fc1),
        "fc1_b": u(ks[10], (FC1_OUT,), k_fc1),
        "fc2_w": u(ks[11], (1, FC1_OUT), k_fc2),
        "fc2_b": u(ks[12], (1,), k_fc2),
    }


if __name__ == "__main__":
    # embedding_dim doubles as vocab size and LSTM input_size in the PyTorch
    # module; it must equal hidden_dim for the original forward to run.
    embedding_dim = 32
    hidden_dim = 32
    n_layers = 1
    B, T = 2, 8

    key = jax.random.PRNGKey(0)
    k_par, k_tok, k_h, k_c = jax.random.split(key, 4)

    raw = init_params(k_par, embedding_dim, hidden_dim)
    kp = prepare_kernel_params(raw)
    tokens = jax.random.randint(k_tok, (B, T), 0, embedding_dim, dtype=jnp.int32)

    # torch.nn.init.xavier_normal_ on a (2*n_layers, B, H) tensor:
    #   fan_in = B*H, fan_out = 2*n_layers*H, std = sqrt(2/(fan_in+fan_out))
    fan_in = B * hidden_dim
    fan_out = 2 * n_layers * hidden_dim
    xav_std = jnp.sqrt(2.0 / (fan_in + fan_out))
    h0 = xav_std * jax.random.normal(k_h, (2 * n_layers, B, hidden_dim), jnp.float32)
    c0 = xav_std * jax.random.normal(k_c, (2 * n_layers, B, hidden_dim), jnp.float32)

    out = model_forward(tokens, kp, h0, c0)
    out = jax.block_until_ready(out)
    assert out.shape == (B, 1) and out.dtype == jnp.float32
    assert bool(jnp.all(jnp.isfinite(out)))

    ref = reference_forward(tokens, raw, h0, c0)
    # 5e-2 tolerance accommodates bf16 MXU operands (table, Whh, fc1) compounded
    # over the 8-step recurrence; reference is pure f32.
    max_err = float(jnp.max(jnp.abs(out - ref)))
    assert max_err < 5e-2, (max_err, out, ref)

    print("KERNEL_OK")
</pallas_src>

<mosaic_0001>
module attributes {stable_mosaic.version = 11 : i64} {
  func.func @lstm_head_kernel(%arg0: memref<16x1xi32, #tpu.memory_space<vmem>>, %arg1: memref<96x256xbf16, #tpu.memory_space<vmem>>, %arg2: memref<64x384xbf16, #tpu.memory_space<vmem>>, %arg3: memref<3x384xf32, #tpu.memory_space<vmem>>, %arg4: memref<4x64xf32, #tpu.memory_space<vmem>>, %arg5: memref<2x1xf32, #tpu.memory_space<vmem>>) attributes {dimension_semantics = [], scalar_prefetch = 0 : i64, scratch_operands = 0 : i64, tpu.core_type = #tpu.core_type<tc>} {
    %c0 = arith.constant 0 : index
    %c0_0 = arith.constant 0 : index
    %0 = vector.load %arg1[%c0, %c0_0] : memref<96x256xbf16, #tpu.memory_space<vmem>>, vector<32x256xbf16>
    %c32 = arith.constant 32 : index
    %c0_1 = arith.constant 0 : index
    %1 = vector.load %arg1[%c32, %c0_1] : memref<96x256xbf16, #tpu.memory_space<vmem>>, vector<64x256xbf16>
    %c32_2 = arith.constant 32 : index
    %c0_3 = arith.constant 0 : index
    %2 = vector.load %arg1[%c32_2, %c0_3] : memref<96x256xbf16, #tpu.memory_space<vmem>>, vector<32x128xbf16>
    %c0_4 = arith.constant 0 : index
    %c0_5 = arith.constant 0 : index
    %3 = vector.load %arg0[%c0_4, %c0_5] : memref<16x1xi32, #tpu.memory_space<vmem>>, vector<16x1xi32>
    %4 = tpu.iota {dimensions = array<i32: 1>} : vector<16x32xi32>
    %5 = vector.broadcast %3 : vector<16x1xi32> to vector<16x32xi32>
    %6 = arith.cmpi eq, %4, %5 : vector<16x32xi32>
    %7 = arith.extui %6 : vector<16x32xi1> to vector<16x32xi32>
    %8 = arith.sitofp %7 : vector<16x32xi32> to vector<16x32xf32>
    %9 = arith.truncf %8 : vector<16x32xf32> to vector<16x32xbf16>
    %cst = arith.constant dense<0.000000e+00> : vector<16x256xf32>
    %10 = tpu.matmul %9, %0, %cst {dimension_numbers = #tpu.dot_dimension_numbers<[1], [0], [0], [1], [0, 0, 1, 1], [], []>} : vector<16x32xbf16>, vector<32x256xbf16>, vector<16x256xf32> -> vector<16x256xf32>
    %11 = vector.extract_strided_slice %10 {offsets = [0, 0], sizes = [2, 128], strides = [1, 1]} : vector<16x256xf32> to vector<2x128xf32>
    %12 = vector.extract_strided_slice %10 {offsets = [2, 0], sizes = [2, 128], strides = [1, 1]} : vector<16x256xf32> to vector<2x128xf32>
    %13 = vector.extract_strided_slice %10 {offsets = [4, 0], sizes = [2, 128], strides = [1, 1]} : vector<16x256xf32> to vector<2x128xf32>
    %14 = vector.extract_strided_slice %10 {offsets = [6, 0], sizes = [2, 128], strides = [1, 1]} : vector<16x256xf32> to vector<2x128xf32>
    %15 = vector.extract_strided_slice %10 {offsets = [8, 0], sizes = [2, 128], strides = [1, 1]} : vector<16x256xf32> to vector<2x128xf32>
    %16 = vector.extract_strided_slice %10 {offsets = [10, 0], sizes = [2, 128], strides = [1, 1]} : vector<16x256xf32> to vector<2x128xf32>
    %17 = vector.extract_strided_slice %10 {offsets = [12, 0], sizes = [2, 128], strides = [1, 1]} : vector<16x256xf32> to vector<2x128xf32>
    %18 = vector.extract_strided_slice %10 {offsets = [14, 0], sizes = [2, 128], strides = [1, 1]} : vector<16x256xf32> to vector<2x128xf32>
    %19 = vector.extract_strided_slice %10 {offsets = [14, 128], sizes = [2, 128], strides = [1, 1]} : vector<16x256xf32> to vector<2x128xf32>
    %c0_6 = arith.constant 0 : index
    %c0_7 = arith.constant 0 : index
    %20 = vector.load %arg4[%c0_6, %c0_7] : memref<4x64xf32, #tpu.memory_space<vmem>>, vector<2x64xf32>
    %c2 = arith.constant 2 : index
    %c0_8 = arith.constant 0 : index
    %21 = vector.load %arg4[%c2, %c0_8] : memref<4x64xf32, #tpu.memory_space<vmem>>, vector<2x32xf32>
    %c2_9 = arith.constant 2 : index
    %c32_10 = arith.constant 32 : index
    %22 = vector.load %arg4[%c2_9, %c32_10] : memref<4x64xf32, #tpu.memory_space<vmem>>, vector<2x32xf32>
    %23 = tpu.concatenate %11, %19 in 1 : vector<2x128xf32>, vector<2x128xf32> -> vector<2x256xf32>
    %24 = arith.truncf %20 : vector<2x64xf32> to vector<2x64xbf16>
    %cst_11 = arith.constant dense<0.000000e+00> : vector<2x256xf32>
    %25 = tpu.matmul %24, %1, %cst_11 {dimension_numbers = #tpu.dot_dimension_numbers<[1], [0], [0], [1], [0, 0, 1, 1], [], []>} : vector<2x64xbf16>, vector<64x256xbf16>, vector<2x256xf32> -> vector<2x256xf32>
    %26 = arith.addf %23, %25 : vector<2x256xf32>
    %27 = vector.extract_strided_slice %26 {offsets = [0, 0], sizes = [2, 128], strides = [1, 1]} : vector<2x256xf32> to vector<2x128xf32>
    %28 = vector.extract_strided_slice %27 {offsets = [0, 0], sizes = [2, 96], strides = [1, 1]} : vector<2x128xf32> to vector<2x96xf32>
    %29 = arith.negf %28 : vector<2x96xf32>
    %30 = math.exp %29 : vector<2x96xf32>
    %cst_12 = arith.constant 1.000000e+00 : f32
    %31 = vector.broadcast %cst_12 : f32 to vector<2x96xf32>
    %32 = arith.addf %31, %30 : vector<2x96xf32>
    %33 = arith.divf %31, %32 : vector<2x96xf32>
    %34 = vector.extract_strided_slice %27 {offsets = [0, 96], sizes = [2, 32], strides = [1, 1]} : vector<2x128xf32> to vector<2x32xf32>
    %35 = math.tanh %34 : vector<2x32xf32>
    %36 = vector.extract_strided_slice %33 {offsets = [0, 0], sizes = [2, 32], strides = [1, 1]} : vector<2x96xf32> to vector<2x32xf32>
    %37 = vector.extract_strided_slice %33 {offsets = [0, 32], sizes = [2, 32], strides = [1, 1]} : vector<2x96xf32> to vector<2x32xf32>
    %38 = vector.extract_strided_slice %33 {offsets = [0, 64], sizes = [2, 32], strides = [1, 1]} : vector<2x96xf32> to vector<2x32xf32>
    %39 = arith.mulf %37, %21 : vector<2x32xf32>
    %40 = arith.mulf %36, %35 : vector<2x32xf32>
    %41 = arith.addf %39, %40 : vector<2x32xf32>
    %42 = math.tanh %41 : vector<2x32xf32>
    %43 = arith.mulf %38, %42 : vector<2x32xf32>
    %44 = vector.extract_strided_slice %26 {offsets = [0, 128], sizes = [2, 128], strides = [1, 1]} : vector<2x256xf32> to vector<2x128xf32>
    %45 = vector.extract_strided_slice %44 {offsets = [0, 0], sizes = [2, 96], strides = [1, 1]} : vector<2x128xf32> to vector<2x96xf32>
    %46 = arith.negf %45 : vector<2x96xf32>
    %47 = math.exp %46 : vector<2x96xf32>
    %cst_13 = arith.constant 1.000000e+00 : f32
    %48 = vector.broadcast %cst_13 : f32 to vector<2x96xf32>
    %49 = arith.addf %48, %47 : vector<2x96xf32>
    %50 = arith.divf %48, %49 : vector<2x96xf32>
    %51 = vector.extract_strided_slice %44 {offsets = [0, 96], sizes = [2, 32], strides = [1, 1]} : vector<2x128xf32> to vector<2x32xf32>
    %52 = math.tanh %51 : vector<2x32xf32>
    %53 = vector.extract_strided_slice %50 {offsets = [0, 0], sizes = [2, 32], strides = [1, 1]} : vector<2x96xf32> to vector<2x32xf32>
    %54 = vector.extract_strided_slice %50 {offsets = [0, 32], sizes = [2, 32], strides = [1, 1]} : vector<2x96xf32> to vector<2x32xf32>
    %55 = vector.extract_strided_slice %50 {offsets = [0, 64], sizes = [2, 32], strides = [1, 1]} : vector<2x96xf32> to vector<2x32xf32>
    %56 = arith.mulf %54, %22 : vector<2x32xf32>
    %57 = arith.mulf %53, %52 : vector<2x32xf32>
    %58 = arith.addf %56, %57 : vector<2x32xf32>
    %59 = math.tanh %58 : vector<2x32xf32>
    %60 = arith.mulf %55, %59 : vector<2x32xf32>
    %61 = arith.truncf %43 : vector<2x32xf32> to vector<2x32xbf16>
    %cst_14 = arith.constant dense<0.000000e+00> : vector<2x128xf32>
    %62 = tpu.matmul %61, %2, %cst_14 {dimension_numbers = #tpu.dot_dimension_numbers<[1], [0], [0], [1], [0, 0, 1, 1], [], []>} : vector<2x32xbf16>, vector<32x128xbf16>, vector<2x128xf32> -> vector<2x128xf32>
    %63 = arith.addf %12, %62 : vector<2x128xf32>
    %64 = vector.extract_strided_slice %63 {offsets = [0, 0], sizes = [2, 96], strides = [1, 1]} : vector<2x128xf32> to vector<2x96xf32>
    %65 = arith.negf %64 : vector<2x96xf32>
    %66 = math.exp %65 : vector<2x96xf32>
    %cst_15 = arith.constant 1.000000e+00 : f32
    %67 = vector.broadcast %cst_15 : f32 to vector<2x96xf32>
    %68 = arith.addf %67, %66 : vector<2x96xf32>
    %69 = arith.divf %67, %68 : vector<2x96xf32>
    %70 = vector.extract_strided_slice %63 {offsets = [0, 96], sizes = [2, 32], strides = [1, 1]} : vector<2x128xf32> to vector<2x32xf32>
    %71 = math.tanh %70 : vector<2x32xf32>
    %72 = vector.extract_strided_slice %69 {offsets = [0, 0], sizes = [2, 32], strides = [1, 1]} : vector<2x96xf32> to vector<2x32xf32>
    %73 = vector.extract_strided_slice %69 {offsets = [0, 32], sizes = [2, 32], strides = [1, 1]} : vector<2x96xf32> to vector<2x32xf32>
    %74 = vector.extract_strided_slice %69 {offsets = [0, 64], sizes = [2, 32], strides = [1, 1]} : vector<2x96xf32> to vector<2x32xf32>
    %75 = arith.mulf %73, %41 : vector<2x32xf32>
    %76 = arith.mulf %72, %71 : vector<2x32xf32>
    %77 = arith.addf %75, %76 : vector<2x32xf32>
    %78 = math.tanh %77 : vector<2x32xf32>
    %79 = arith.mulf %74, %78 : vector<2x32xf32>
    %80 = arith.truncf %79 : vector<2x32xf32> to vector<2x32xbf16>
    %cst_16 = arith.constant dense<0.000000e+00> : vector<2x128xf32>
    %81 = tpu.matmul %80, %2, %cst_16 {dimension_numbers = #tpu.dot_dimension_numbers<[1], [0], [0], [1], [0, 0, 1, 1], [], []>} : vector<2x32xbf16>, vector<32x128xbf16>, vector<2x128xf32> -> vector<2x128xf32>
    %82 = arith.addf %13, %81 : vector<2x128xf32>
    %83 = vector.extract_strided_slice %82 {offsets = [0, 0], sizes = [2, 96], strides = [1, 1]} : vector<2x128xf32> to vector<2x96xf32>
    %84 = arith.negf %83 : vector<2x96xf32>
    %85 = math.exp %84 : vector<2x96xf32>
    %cst_17 = arith.constant 1.000000e+00 : f32
    %86 = vector.broadcast %cst_17 : f32 to vector<2x96xf32>
    %87 = arith.addf %86, %85 : vector<2x96xf32>
    %88 = arith.divf %86, %87 : vector<2x96xf32>
    %89 = vector.extract_strided_slice %82 {offsets = [0, 96], sizes = [2, 32], strides = [1, 1]} : vector<2x128xf32> to vector<2x32xf32>
    %90 = math.tanh %89 : vector<2x32xf32>
    %91 = vector.extract_strided_slice %88 {offsets = [0, 0], sizes = [2, 32], strides = [1, 1]} : vector<2x96xf32> to vector<2x32xf32>
    %92 = vector.extract_strided_slice %88 {offsets = [0, 32], sizes = [2, 32], strides = [1, 1]} : vector<2x96xf32> to vector<2x32xf32>
    %93 = vector.extract_strided_slice %88 {offsets = [0, 64], sizes = [2, 32], strides = [1, 1]} : vector<2x96xf32> to vector<2x32xf32>
    %94 = arith.mulf %92, %77 : vector<2x32xf32>
    %95 = arith.mulf %91, %90 : vector<2x32xf32>
    %96 = arith.addf %94, %95 : vector<2x32xf32>
    %97 = math.tanh %96 : vector<2x32xf32>
    %98 = arith.mulf %93, %97 : vector<2x32xf32>
    %99 = arith.truncf %98 : vector<2x32xf32> to vector<2x32xbf16>
    %cst_18 = arith.constant dense<0.000000e+00> : vector<2x128xf32>
    %100 = tpu.matmul %99, %2, %cst_18 {dimension_numbers = #tpu.dot_dimension_numbers<[1], [0], [0], [1], [0, 0, 1, 1], [], []>} : vector<2x32xbf16>, vector<32x128xbf16>, vector<2x128xf32> -> vector<2x128xf32>
    %101 = arith.addf %14, %100 : vector<2x128xf32>
    %102 = vector.extract_strided_slice %101 {offsets = [0, 0], sizes = [2, 96], strides = [1, 1]} : vector<2x128xf32> to vector<2x96xf32>
    %103 = arith.negf %102 : vector<2x96xf32>
    %104 = math.exp %103 : vector<2x96xf32>
    %cst_19 = arith.constant 1.000000e+00 : f32
    %105 = vector.broadcast %cst_19 : f32 to vector<2x96xf32>
    %106 = arith.addf %105, %104 : vector<2x96xf32>
    %107 = arith.divf %105, %106 : vector<2x96xf32>
    %108 = vector.extract_strided_slice %101 {offsets = [0, 96], sizes = [2, 32], strides = [1, 1]} : vector<2x128xf32> to vector<2x32xf32>
    %109 = math.tanh %108 : vector<2x32xf32>
    %110 = vector.extract_strided_slice %107 {offsets = [0, 0], sizes = [2, 32], strides = [1, 1]} : vector<2x96xf32> to vector<2x32xf32>
    %111 = vector.extract_strided_slice %107 {offsets = [0, 32], sizes = [2, 32], strides = [1, 1]} : vector<2x96xf32> to vector<2x32xf32>
    %112 = vector.extract_strided_slice %107 {offsets = [0, 64], sizes = [2, 32], strides = [1, 1]} : vector<2x96xf32> to vector<2x32xf32>
    %113 = arith.mulf %111, %96 : vector<2x32xf32>
    %114 = arith.mulf %110, %109 : vector<2x32xf32>
    %115 = arith.addf %113, %114 : vector<2x32xf32>
    %116 = math.tanh %115 : vector<2x32xf32>
    %117 = arith.mulf %112, %116 : vector<2x32xf32>
    %118 = arith.truncf %117 : vector<2x32xf32> to vector<2x32xbf16>
    %cst_20 = arith.constant dense<0.000000e+00> : vector<2x128xf32>
    %119 = tpu.matmul %118, %2, %cst_20 {dimension_numbers = #tpu.dot_dimension_numbers<[1], [0], [0], [1], [0, 0, 1, 1], [], []>} : vector<2x32xbf16>, vector<32x128xbf16>, vector<2x128xf32> -> vector<2x128xf32>
    %120 = arith.addf %15, %119 : vector<2x128xf32>
    %121 = vector.extract_strided_slice %120 {offsets = [0, 0], sizes = [2, 96], strides = [1, 1]} : vector<2x128xf32> to vector<2x96xf32>
    %122 = arith.negf %121 : vector<2x96xf32>
    %123 = math.exp %122 : vector<2x96xf32>
    %cst_21 = arith.constant 1.000000e+00 : f32
    %124 = vector.broadcast %cst_21 : f32 to vector<2x96xf32>
    %125 = arith.addf %124, %123 : vector<2x96xf32>
    %126 = arith.divf %124, %125 : vector<2x96xf32>
    %127 = vector.extract_strided_slice %120 {offsets = [0, 96], sizes = [2, 32], strides = [1, 1]} : vector<2x128xf32> to vector<2x32xf32>
    %128 = math.tanh %127 : vector<2x32xf32>
    %129 = vector.extract_strided_slice %126 {offsets = [0, 0], sizes = [2, 32], strides = [1, 1]} : vector<2x96xf32> to vector<2x32xf32>
    %130 = vector.extract_strided_slice %126 {offsets = [0, 32], sizes = [2, 32], strides = [1, 1]} : vector<2x96xf32> to vector<2x32xf32>
    %131 = vector.extract_strided_slice %126 {offsets = [0, 64], sizes = [2, 32], strides = [1, 1]} : vector<2x96xf32> to vector<2x32xf32>
    %132 = arith.mulf %130, %115 : vector<2x32xf32>
    %133 = arith.mulf %129, %128 : vector<2x32xf32>
    %134 = arith.addf %132, %133 : vector<2x32xf32>
    %135 = math.tanh %134 : vector<2x32xf32>
    %136 = arith.mulf %131, %135 : vector<2x32xf32>
    %137 = arith.truncf %136 : vector<2x32xf32> to vector<2x32xbf16>
    %cst_22 = arith.constant dense<0.000000e+00> : vector<2x128xf32>
    %138 = tpu.matmul %137, %2, %cst_22 {dimension_numbers = #tpu.dot_dimension_numbers<[1], [0], [0], [1], [0, 0, 1, 1], [], []>} : vector<2x32xbf16>, vector<32x128xbf16>, vector<2x128xf32> -> vector<2x128xf32>
    %139 = arith.addf %16, %138 : vector<2x128xf32>
    %140 = vector.extract_strided_slice %139 {offsets = [0, 0], sizes = [2, 96], strides = [1, 1]} : vector<2x128xf32> to vector<2x96xf32>
    %141 = arith.negf %140 : vector<2x96xf32>
    %142 = math.exp %141 : vector<2x96xf32>
    %cst_23 = arith.constant 1.000000e+00 : f32
    %143 = vector.broadcast %cst_23 : f32 to vector<2x96xf32>
    %144 = arith.addf %143, %142 : vector<2x96xf32>
    %145 = arith.divf %143, %144 : vector<2x96xf32>
    %146 = vector.extract_strided_slice %139 {offsets = [0, 96], sizes = [2, 32], strides = [1, 1]} : vector<2x128xf32> to vector<2x32xf32>
    %147 = math.tanh %146 : vector<2x32xf32>
    %148 = vector.extract_strided_slice %145 {offsets = [0, 0], sizes = [2, 32], strides = [1, 1]} : vector<2x96xf32> to vector<2x32xf32>
    %149 = vector.extract_strided_slice %145 {offsets = [0, 32], sizes = [2, 32], strides = [1, 1]} : vector<2x96xf32> to vector<2x32xf32>
    %150 = vector.extract_strided_slice %145 {offsets = [0, 64], sizes = [2, 32], strides = [1, 1]} : vector<2x96xf32> to vector<2x32xf32>
    %151 = arith.mulf %149, %134 : vector<2x32xf32>
    %152 = arith.mulf %148, %147 : vector<2x32xf32>
    %153 = arith.addf %151, %152 : vector<2x32xf32>
    %154 = math.tanh %153 : vector<2x32xf32>
    %155 = arith.mulf %150, %154 : vector<2x32xf32>
    %156 = arith.truncf %155 : vector<2x32xf32> to vector<2x32xbf16>
    %cst_24 = arith.constant dense<0.000000e+00> : vector<2x128xf32>
    %157 = tpu.matmul %156, %2, %cst_24 {dimension_numbers = #tpu.dot_dimension_numbers<[1], [0], [0], [1], [0, 0, 1, 1], [], []>} : vector<2x32xbf16>, vector<32x128xbf16>, vector<2x128xf32> -> vector<2x128xf32>
    %158 = arith.addf %17, %157 : vector<2x128xf32>
    %159 = vector.extract_strided_slice %158 {offsets = [0, 0], sizes = [2, 96], strides = [1, 1]} : vector<2x128xf32> to vector<2x96xf32>
    %160 = arith.negf %159 : vector<2x96xf32>
    %161 = math.exp %160 : vector<2x96xf32>
    %cst_25 = arith.constant 1.000000e+00 : f32
    %162 = vector.broadcast %cst_25 : f32 to vector<2x96xf32>
    %163 = arith.addf %162, %161 : vector<2x96xf32>
    %164 = arith.divf %162, %163 : vector<2x96xf32>
    %165 = vector.extract_strided_slice %158 {offsets = [0, 96], sizes = [2, 32], strides = [1, 1]} : vector<2x128xf32> to vector<2x32xf32>
    %166 = math.tanh %165 : vector<2x32xf32>
    %167 = vector.extract_strided_slice %164 {offsets = [0, 0], sizes = [2, 32], strides = [1, 1]} : vector<2x96xf32> to vector<2x32xf32>
    %168 = vector.extract_strided_slice %164 {offsets = [0, 32], sizes = [2, 32], strides = [1, 1]} : vector<2x96xf32> to vector<2x32xf32>
    %169 = vector.extract_strided_slice %164 {offsets = [0, 64], sizes = [2, 32], strides = [1, 1]} : vector<2x96xf32> to vector<2x32xf32>
    %170 = arith.mulf %168, %153 : vector<2x32xf32>
    %171 = arith.mulf %167, %166 : vector<2x32xf32>
    %172 = arith.addf %170, %171 : vector<2x32xf32>
    %173 = math.tanh %172 : vector<2x32xf32>
    %174 = arith.mulf %169, %173 : vector<2x32xf32>
    %175 = arith.truncf %174 : vector<2x32xf32> to vector<2x32xbf16>
    %cst_26 = arith.constant dense<0.000000e+00> : vector<2x128xf32>
    %176 = tpu.matmul %175, %2, %cst_26 {dimension_numbers = #tpu.dot_dimension_numbers<[1], [0], [0], [1], [0, 0, 1, 1], [], []>} : vector<2x32xbf16>, vector<32x128xbf16>, vector<2x128xf32> -> vector<2x128xf32>
    %177 = arith.addf %18, %176 : vector<2x128xf32>
    %178 = vector.extract_strided_slice %177 {offsets = [0, 0], sizes = [2, 96], strides = [1, 1]} : vector<2x128xf32> to vector<2x96xf32>
    %179 = arith.negf %178 : vector<2x96xf32>
    %180 = math.exp %179 : vector<2x96xf32>
    %cst_27 = arith.constant 1.000000e+00 : f32
    %181 = vector.broadcast %cst_27 : f32 to vector<2x96xf32>
    %182 = arith.addf %181, %180 : vector<2x96xf32>
    %183 = arith.divf %181, %182 : vector<2x96xf32>
    %184 = vector.extract_strided_slice %177 {offsets = [0, 96], sizes = [2, 32], strides = [1, 1]} : vector<2x128xf32> to vector<2x32xf32>
    %185 = math.tanh %184 : vector<2x32xf32>
    %186 = vector.extract_strided_slice %183 {offsets = [0, 0], sizes = [2, 32], strides = [1, 1]} : vector<2x96xf32> to vector<2x32xf32>
    %187 = vector.extract_strided_slice %183 {offsets = [0, 32], sizes = [2, 32], strides = [1, 1]} : vector<2x96xf32> to vector<2x32xf32>
    %188 = vector.extract_strided_slice %183 {offsets = [0, 64], sizes = [2, 32], strides = [1, 1]} : vector<2x96xf32> to vector<2x32xf32>
    %189 = arith.mulf %187, %172 : vector<2x32xf32>
    %190 = arith.mulf %186, %185 : vector<2x32xf32>
    %191 = arith.addf %189, %190 : vector<2x32xf32>
    %192 = math.tanh %191 : vector<2x32xf32>
    %193 = arith.mulf %188, %192 : vector<2x32xf32>
    %194 = tpu.concatenate %193, %60 in 1 : vector<2x32xf32>, vector<2x32xf32> -> vector<2x64xf32>
    %195 = arith.truncf %194 : vector<2x64xf32> to vector<2x64xbf16>
    %c0_28 = arith.constant 0 : index
    %c0_29 = arith.constant 0 : index
    %196 = vector.load %arg2[%c0_28, %c0_29] : memref<64x384xbf16, #tpu.memory_space<vmem>>, vector<64x384xbf16>
    %cst_30 = arith.constant dense<0.000000e+00> : vector<2x384xf32>
    %197 = tpu.matmul %195, %196, %cst_30 {dimension_numbers = #tpu.dot_dimension_numbers<[1], [0], [0], [1], [0, 0, 1, 1], [], []>} : vector<2x64xbf16>, vector<64x384xbf16>, vector<2x384xf32> -> vector<2x384xf32>
    %c0_31 = arith.constant 0 : index
    %c0_32 = arith.constant 0 : index
    %198 = vector.load %arg3[%c0_31, %c0_32] : memref<3x384xf32, #tpu.memory_space<vmem>>, vector<1x384xf32>
    %199 = vector.broadcast %198 : vector<1x384xf32> to vector<2x384xf32>
    %200 = arith.addf %197, %199 : vector<2x384xf32>
    %cst_33 = arith.constant 0.000000e+00 : f32
    %201 = vector.broadcast %cst_33 : f32 to vector<2x384xf32>
    %202 = arith.maximumf %200, %201 : vector<2x384xf32>
    %c1 = arith.constant 1 : index
    %c0_34 = arith.constant 0 : index
    %203 = vector.load %arg3[%c1, %c0_34] : memref<3x384xf32, #tpu.memory_space<vmem>>, vector<1x384xf32>
    %204 = vector.broadcast %203 : vector<1x384xf32> to vector<2x384xf32>
    %205 = arith.mulf %202, %204 : vector<2x384xf32>
    %cst_35 = arith.constant dense<0.000000e+00> : vector<2xf32>
    %206 = vector.multi_reduction <add>, %205, %cst_35 [1] : vector<2x384xf32> to vector<2xf32>
    %207 = vector.shape_cast %206 : vector<2xf32> to vector<2x1xf32>
    %c2_36 = arith.constant 2 : index
    %c0_37 = arith.constant 0 : index
    %208 = vector.load %arg3[%c2_36, %c0_37] : memref<3x384xf32, #tpu.memory_space<vmem>>, vector<1x1xf32>
    %209 = vector.broadcast %208 : vector<1x1xf32> to vector<2x1xf32>
    %210 = arith.addf %207, %209 : vector<2x1xf32>
    %211 = arith.negf %210 : vector<2x1xf32>
    %212 = math.exp %211 : vector<2x1xf32>
    %cst_38 = arith.constant 1.000000e+00 : f32
    %213 = vector.broadcast %cst_38 : f32 to vector<2x1xf32>
    %214 = arith.addf %213, %212 : vector<2x1xf32>
    %215 = arith.divf %213, %214 : vector<2x1xf32>
    %c0_39 = arith.constant 0 : index
    %c0_40 = arith.constant 0 : index
    %216 = vector.load %arg5[%c0_39, %c0_40] : memref<2x1xf32, #tpu.memory_space<vmem>>, vector<2x1xf32>
    tpu.vector_store %arg5[%c0_39, %c0_40], %215 {strides = array<i32>} : memref<2x1xf32, #tpu.memory_space<vmem>>, vector<2x1xf32>,
    return
  }
}

</mosaic_0001>

<llo_original>
// kernel: model_forward.1
$region0: #{model_forward.1}
  #allocation0 [shape = 'u32[]', space=smem, size = 0x4, offset = 0x4, fixed_abs, tag = 'smem constant byte address 0x4 - core index']
  #allocation1 [shape = 'u32[144,128]{1,0:T(1,128)}', space=vmem, size = 0x12000, scoped, tag = 'internal scratch']
  %s0 = inlined_call_operand.vmem [shape: s32[16,1], index: 0, kind: input, shape index: {}]
  %s1 = inlined_call_operand.hbm [shape: bf16[96,256], index: 1, kind: input, shape index: {}]
  %s2 = inlined_call_operand.hbm [shape: bf16[64,384], index: 2, kind: input, shape index: {}]
  %s3 = inlined_call_operand.vmem [shape: f32[3,384], index: 3, kind: input, shape index: {}]
  %s4 = inlined_call_operand.vmem [shape: f32[4,64], index: 4, kind: input, shape index: {}]
  %s5 = inlined_call_operand.vmem [shape: f32[2,1], index: 5, kind: output, shape index: {}]
  %s6 = sld [smem:[#allocation0]]
  $region38: #{model_forward.1} parent=0
    _
  %s8 = ssub.s32 1, %s6
  %s9 = scalar_select 0, %s8, %s6
  $region1: #{model_forward.1} parent=0
    #allocation2 [shape = 'u8[49152]{0}', space=vmem, size = 0xc000, scoped, tag = 'input window, operand 1, single buffered']
    #allocation3 [shape = 's32[1]{0}', space=sflag, size = 0x4, scoped, tag = 'scoped memory for model_forward.1']
    #allocation4 [shape = 'u8[49152]{0}', space=vmem, size = 0xc000, scoped, tag = 'input window, operand 2, single buffered']
    #allocation5 [shape = 's32[1]{0}', space=sflag, size = 0x4, scoped, tag = 'scoped memory for model_forward.1']
    %10 = vsyncpa [#allocation3], 0
    %11 = vsyncpa [#allocation5], 0
    // Predicated region
    $region2: #{model_forward.1} parent=1 // pred_check
      _
    $region3: #{model_forward.1} parent=1 // pred_check_branch
      %13 = sbr.rel (0) target = $region5
    $region4: #{model_forward.1} parent=1 // pred_region
      _
    $region5: #{model_forward.1} parent=1 // pred_fallthru
      _
    // Predicated region
    $region6: #{model_forward.1} parent=1 // pred_check
      _
    $region7: #{model_forward.1} parent=1 // pred_check_branch
      %15 = sbr.rel (0) target = $region9
    $region8: #{model_forward.1} parent=1 // pred_region
      %s17 = ssub.s32 1536, 1536
      %18 = vsyncadd [#allocation3], %s17
      %s19 = sshll.u32 [#allocation2], 4
      %s20 = int_to_ptr.vmem [resolvable:$true] %s19
      %25 = dma.hbm_to_vmem [thread:$0]  %s1, 1536, %s20, [#allocation3], 128, 128, 8
    $region9: #{model_forward.1} parent=1 // pred_fallthru
      _
    // Predicated region
    $region10: #{model_forward.1} parent=1 // pred_check
      _
    $region11: #{model_forward.1} parent=1 // pred_check_branch
      %27 = sbr.rel (0) target = $region13
    $region12: #{model_forward.1} parent=1 // pred_region
      %s29 = ssub.s32 1536, 1536
      %30 = vsyncadd [#allocation5], %s29
      %s31 = sshll.u32 [#allocation4], 4
      %s32 = int_to_ptr.vmem [resolvable:$true] %s31
      %37 = dma.hbm_to_vmem [thread:$0]  %s2, 1536, %s32, [#allocation5], 192, 192, 12
    $region13: #{model_forward.1} parent=1 // pred_fallthru
      _
    // Predicated region
    $region14: #{model_forward.1} parent=1 // pred_check
      _
    $region15: #{model_forward.1} parent=1 // pred_check_branch
      %39 = sbr.rel (0) target = $region17
    $region16: #{model_forward.1} parent=1 // pred_region
      _
    $region17: #{model_forward.1} parent=1 // pred_fallthru
      _
    // Predicated region
    $region18: #{model_forward.1} parent=1 // pred_check
      _
    $region19: #{model_forward.1} parent=1 // pred_check_branch
      %41 = sbr.rel (0) target = $region21
    $region20: #{model_forward.1} parent=1 // pred_region
      _
    $region21: #{model_forward.1} parent=1 // pred_fallthru
      _
    // Predicated region
    $region22: #{model_forward.1} parent=1 // pred_check
      _
    $region23: #{model_forward.1} parent=1 // pred_check_branch
      %43 = sbr.rel (0) target = $region25
    $region24: #{model_forward.1} parent=1 // pred_region
      %44 = dma.done [#allocation3], 1536
    $region25: #{model_forward.1} parent=1 // pred_fallthru
      _
    // Predicated region
    $region26: #{model_forward.1} parent=1 // pred_check
      _
    $region27: #{model_forward.1} parent=1 // pred_check_branch
      %46 = sbr.rel (0) target = $region29
    $region28: #{model_forward.1} parent=1 // pred_region
      %47 = dma.done [#allocation5], 1536
    $region29: #{model_forward.1} parent=1 // pred_fallthru
      _
    %v49 = vld [vmem:[#allocation2] sm:$0xff]
    %v50 = vld [vmem:[#allocation2 + $0x8] sm:$0xff]
    %v51 = vld [vmem:[#allocation2 + $0x10] sm:$0xff]
    %v52 = vld [vmem:[#allocation2 + $0x18] sm:$0xff]
    %v53 = vld [vmem:[#allocation2 + $0x20] sm:$0xff]
    %v54 = vld [vmem:[#allocation2 + $0x28] sm:$0xff]
    %v55 = vld [vmem:[#allocation2 + $0x30] sm:$0xff]
    %v56 = vld [vmem:[#allocation2 + $0x38] sm:$0xff]
    %v57 = vld [vmem:[#allocation2 + $0x40] sm:$0xff]
    %v58 = vld [vmem:[#allocation2 + $0x48] sm:$0xff]
    %v59 = vld [vmem:[#allocation2 + $0x50] sm:$0xff]
    %v60 = vld [vmem:[#allocation2 + $0x58] sm:$0xff]
    %v61 = vld [vmem:[#allocation2 + $0x20] sm:$0xf]
    %v62 = vld [vmem:[#allocation2 + $0x28] sm:$0xf]
    %v63 = vld [vmem:[#allocation2 + $0x30] sm:$0xf]
    %v64 = vld [vmem:[#allocation2 + $0x38] sm:$0xf]
    %v65 = vld [vmem:[%s0] sm:$0xff]
    %v66 = vld [vmem:[%s0 + $0x8] sm:$0xff]
    %v67 = vlaneseq
    %v68 = vand.u32 %v67, 127
    %69 = vset.pattern.permute.xlu0 0
    %70 = vperm.xlu0 %69, %v65
    %v71 = vpop.permute.xlu0 %70
    %72 = vset.pattern.permute.xlu0 0
    %73 = vperm.xlu0 %72, %v66
    %v74 = vpop.permute.xlu0 %73
    %vm75 = vcmp.eq.s32.totalorder %v68, %v71
    %vm76 = vcmp.eq.s32.totalorder %v68, %v74
    %v77 = vsel %vm75, 1, 0
    %v78 = vsel %vm76, 1, 0
    %v79 = vcvt.s32.f32 %v77
    %v80 = vcvt.s32.f32 %v78
    %v81 = vpack.c.bf16 %v80, %v79
    %v86 = vunpack.c.l.b16 %v49
    %v87 = vunpack.c.h.b16 %v49
    %v88 = vunpack.c.l.b16 %v50
    %v89 = vunpack.c.h.b16 %v50
    %v90 = vunpack.c.l.b16 %v51
    %v91 = vunpack.c.h.b16 %v51
    %v92 = vunpack.c.l.b16 %v52
    %v93 = vunpack.c.h.b16 %v52
    %v94 = vpack.c.b16 %v88, %v86
    %v95 = vpack.c.b16 %v89, %v87
    %v96 = vpack.c.b16 %v92, %v90
    %v97 = vpack.c.b16 %v93, %v91
    %vm102 = vcmask 261120
    %v104 = vsel %vm102, %v81, 0
    %106 = vmatprep.subr.bf16.mxu0 %v95
    %107 = vmatpush1.bf16.msra.mxu0 %v94
    %108 = vmatprep.subr.bf16.mxu0 %v97
    %109 = vmatpush1.bf16.msra.mxu0 %v96
    %110 = vmatprep.subr.bf16.mxu0 0
    %111 = vmatpush1.bf16.msra.mxu0 0
    %112 = vmatprep.subr.bf16.mxu0 0
    %113 = vmatpush1.bf16.msra.mxu0 0
    %114 = vmatprep.subr.bf16.mxu0 0
    %115 = vmatpush1.bf16.msra.mxu0 0
    %116 = vmatprep.subr.bf16.mxu0 0
    %117 = vmatpush1.bf16.msra.mxu0 0
    %118 = vmatprep.subr.bf16.mxu0 0
    %119 = vmatpush1.bf16.msra.mxu0 0
    %120 = vmatprep.subr.bf16.mxu0 0
    %121 = vmatpush1.bf16.msra.mxu0 0
    %122 = vmatprep.subr.bf16.mxu0 0
    %123 = vmatpush1.bf16.msra.mxu0 0
    %124 = vmatprep.subr.bf16.mxu0 0
    %125 = vmatpush1.bf16.msra.mxu0 0
    %126 = vmatprep.subr.bf16.mxu0 0
    %127 = vmatpush1.bf16.msra.mxu0 0
    %128 = vmatprep.subr.bf16.mxu0 0
    %129 = vmatpush1.bf16.msra.mxu0 0
    %130 = vmatprep.subr.bf16.mxu0 0
    %131 = vmatpush1.bf16.msra.mxu0 0
    %132 = vmatprep.subr.bf16.mxu0 0
    %133 = vmatpush1.bf16.msra.mxu0 0
    %134 = vmatprep.subr.bf16.mxu0 0
    %135 = vmatpush1.bf16.msra.mxu0 0
    %136 = vmatprep.subr.bf16.mxu0 0
    %137 = vmatpush1.bf16.msra.mxu0 0
    %138 = vmatprep.mubr.bf16.mxu0 0
    %139 = vmatmul.mubr.bf16.gmra.mrb[0].mxu0 %v104
    %v140 = vpop.f32.mrb[0].mxu0
    %v141 = vadd.f32 0.0, %v140
    %v142 = vpop.f32.mrb[0].mxu0
    %v143 = vpop.f32.mrb[0].mxu0
    %v144 = vadd.f32 0.0, %v143
    %v145 = vpop.f32.mrb[0].mxu0
    %v146 = vadd.f32 0.0, %v145
    %147 = vdwg.mxu0
    %v148 = vld [vmem:[%s4] sm:$0x3]
    %v149 = vld [vmem:[%s4 + $0x2] sm:$0x3]
    %v151 = vrot.slane %v146, 6
    %v153 = vpack.c.bf16 %v148, %v148
    %v162 = vunpack.c.l.b16 %v53
    %v163 = vunpack.c.h.b16 %v53
    %v164 = vunpack.c.l.b16 %v54
    %v165 = vunpack.c.h.b16 %v54
    %v166 = vunpack.c.l.b16 %v55
    %v167 = vunpack.c.h.b16 %v55
    %v168 = vunpack.c.l.b16 %v56
    %v169 = vunpack.c.h.b16 %v56
    %v170 = vunpack.c.l.b16 %v57
    %v171 = vunpack.c.h.b16 %v57
    %v172 = vunpack.c.l.b16 %v58
    %v173 = vunpack.c.h.b16 %v58
    %v174 = vunpack.c.l.b16 %v59
    %v175 = vunpack.c.h.b16 %v59
    %v176 = vunpack.c.l.b16 %v60
    %v177 = vunpack.c.h.b16 %v60
    %v178 = vpack.c.b16 %v164, %v162
    %v179 = vpack.c.b16 %v165, %v163
    %v180 = vpack.c.b16 %v168, %v166
    %v181 = vpack.c.b16 %v169, %v167
    %v182 = vpack.c.b16 %v172, %v170
    %v183 = vpack.c.b16 %v173, %v171
    %v184 = vpack.c.b16 %v176, %v174
    %v185 = vpack.c.b16 %v177, %v175
    %vm194 = vcmask 523264
    %v196 = vsel %vm194, %v153, 0
    %198 = vmatprep.subr.bf16.mxu0 %v179
    %199 = vmatpush1.bf16.msra.mxu0 %v178
    %200 = vmatprep.subr.bf16.mxu0 %v181
    %201 = vmatpush1.bf16.msra.mxu0 %v180
    %202 = vmatprep.subr.bf16.mxu0 %v183
    %203 = vmatpush1.bf16.msra.mxu0 %v182
    %204 = vmatprep.subr.bf16.mxu0 %v185
    %205 = vmatpush1.bf16.msra.mxu0 %v184
    %206 = vmatprep.subr.bf16.mxu0 0
    %207 = vmatpush1.bf16.msra.mxu0 0
    %208 = vmatprep.subr.bf16.mxu0 0
    %209 = vmatpush1.bf16.msra.mxu0 0
    %210 = vmatprep.subr.bf16.mxu0 0
    %211 = vmatpush1.bf16.msra.mxu0 0
    %212 = vmatprep.subr.bf16.mxu0 0
    %213 = vmatpush1.bf16.msra.mxu0 0
    %214 = vmatprep.subr.bf16.mxu0 0
    %215 = vmatpush1.bf16.msra.mxu0 0
    %216 = vmatprep.subr.bf16.mxu0 0
    %217 = vmatpush1.bf16.msra.mxu0 0
    %218 = vmatprep.subr.bf16.mxu0 0
    %219 = vmatpush1.bf16.msra.mxu0 0
    %220 = vmatprep.subr.bf16.mxu0 0
    %221 = vmatpush1.bf16.msra.mxu0 0
    %222 = vmatprep.subr.bf16.mxu0 0
    %223 = vmatpush1.bf16.msra.mxu0 0
    %224 = vmatprep.subr.bf16.mxu0 0
    %225 = vmatpush1.bf16.msra.mxu0 0
    %226 = vmatprep.subr.bf16.mxu0 0
    %227 = vmatpush1.bf16.msra.mxu0 0
    %228 = vmatprep.subr.bf16.mxu0 0
    %229 = vmatpush1.bf16.msra.mxu0 0
    %230 = vmatprep.mubr.bf16.mxu0 0
    %231 = vmatmul.mubr.bf16.gmra.mrb[0].mxu0 %v196
    %v232 = vpop.f32.mrb[0].mxu0
    %v233 = vadd.f32 0.0, %v232
    %v234 = vpop.f32.mrb[0].mxu0
    %v235 = vadd.f32 0.0, %v234
    %v236 = vpop.f32.mrb[0].mxu0
    %v237 = vpop.f32.mrb[0].mxu0
    %238 = vdwg.mxu0
    %v239 = vadd.f32 %v141, %v233
    %v240 = vadd.f32 %v151, %v235
    %v241 = vxor.u32 %v239, 2147483648
    %v242 = vmul.f32 %v241, 1.442695
    %v243 = vpow.pop %v242
    %v244 = vadd.f32 %v243, 1.0
    %v245 = vrcp.pop %v244
    %v246 = vmul.f32 1.0, %v245
    %v247 = vtanh.pop %v239
    %249 = vrot.lane.b32.xlu0 %v149, 32
    %v250 = vpop.permute.xlu0 %249
    %v252 = vmul.f32 %v246, %v250
    %254 = vrot.lane.b32.xlu0 %v247, 32
    %v255 = vpop.permute.xlu0 %254
    %v257 = vmul.f32 %v246, %v255
    %259 = vrot.lane.b32.xlu0 %v257, 32
    %v260 = vpop.permute.xlu0 %259
    %v262 = vadd.f32 %v252, %v260
    %v263 = vtanh.pop %v262
    %265 = vrot.lane.b32.xlu0 %v263, 32
    %v266 = vpop.permute.xlu0 %265
    %v268 = vmul.f32 %v246, %v266
    %v269 = vxor.u32 %v240, 2147483648
    %v270 = vmul.f32 %v269, 1.442695
    %v271 = vpow.pop %v270
    %v272 = vadd.f32 %v271, 1.0
    %v273 = vrcp.pop %v272
    %v274 = vmul.f32 1.0, %v273
    %v275 = vtanh.pop %v240
    %v276 = vmul.f32 %v274, %v149
    %278 = vrot.lane.b32.xlu0 %v275, 32
    %v279 = vpop.permute.xlu0 %278
    %v281 = vmul.f32 %v274, %v279
    %283 = vrot.lane.b32.xlu0 %v281, 32
    %v284 = vpop.permute.xlu0 %283
    %v286 = vadd.f32 %v276, %v284
    %v287 = vtanh.pop %v286
    %289 = vrot.lane.b32.xlu0 %v287, 32
    %v290 = vpop.permute.xlu0 %289
    %v292 = vmul.f32 %v274, %v290
    %v293 = vpack.c.bf16 %v268, %v268
    %295 = vrot.lane.b32.xlu0 %v293, 64
    %v296 = vpop.permute.xlu0 %295
    %v301 = vunpack.c.l.b16 %v61
    %v302 = vunpack.c.l.b16 %v62
    %v303 = vunpack.c.l.b16 %v63
    %v304 = vunpack.c.l.b16 %v64
    %v305 = vpack.c.b16 %v302, %v301
    %v306 = vpack.c.b16 %v304, %v303
    %v310 = vsel %vm102, %v296, 0
    %312 = vmatprep.subr.bf16.mxu0 0
    %313 = vmatpush1.bf16.msra.mxu0 %v305
    %314 = vmatprep.subr.bf16.mxu0 0
    %315 = vmatpush1.bf16.msra.mxu0 %v306
    %316 = vmatprep.subr.bf16.mxu0 0
    %317 = vmatpush1.bf16.msra.mxu0 0
    %318 = vmatprep.subr.bf16.mxu0 0
    %319 = vmatpush1.bf16.msra.mxu0 0
    %320 = vmatprep.subr.bf16.mxu0 0
    %321 = vmatpush1.bf16.msra.mxu0 0
    %322 = vmatprep.subr.bf16.mxu0 0
    %323 = vmatpush1.bf16.msra.mxu0 0
    %324 = vmatprep.subr.bf16.mxu0 0
    %325 = vmatpush1.bf16.msra.mxu0 0
    %326 = vmatprep.subr.bf16.mxu0 0
    %327 = vmatpush1.bf16.msra.mxu0 0
    %328 = vmatprep.subr.bf16.mxu0 0
    %329 = vmatpush1.bf16.msra.mxu0 0
    %330 = vmatprep.subr.bf16.mxu0 0
    %331 = vmatpush1.bf16.msra.mxu0 0
    %332 = vmatprep.subr.bf16.mxu0 0
    %333 = vmatpush1.bf16.msra.mxu0 0
    %334 = vmatprep.subr.bf16.mxu0 0
    %335 = vmatpush1.bf16.msra.mxu0 0
    %336 = vmatprep.subr.bf16.mxu0 0
    %337 = vmatpush1.bf16.msra.mxu0 0
    %338 = vmatprep.subr.bf16.mxu0 0
    %339 = vmatpush1.bf16.msra.mxu0 0
    %340 = vmatprep.subr.bf16.mxu0 0
    %341 = vmatpush1.bf16.msra.mxu0 0
    %342 = vmatprep.subr.bf16.mxu0 0
    %343 = vmatpush1.bf16.msra.mxu0 0
    %344 = vmatprep.mubr.bf16.mxu0 0
    %345 = vmatmul.mubr.bf16.gmra.mrb[0].mxu0 %v310
    %v346 = vpop.f32.mrb[0].mxu0
    %v347 = vadd.f32 0.0, %v346
    %v348 = vpop.f32.mrb[0].mxu0
    %v349 = vpop.f32.mrb[0].mxu0
    %v350 = vpop.f32.mrb[0].mxu0
    %351 = vdwg.mxu0
    %v353 = vrot.slane %v347, 6
    %v355 = vadd.f32 %v141, %v353
    %v356 = vxor.u32 %v355, 2147483648
    %v357 = vmul.f32 %v356, 1.442695
    %v358 = vpow.pop %v357
    %v359 = vadd.f32 %v358, 1.0
    %v360 = vrcp.pop %v359
    %v361 = vmul.f32 1.0, %v360
    %v362 = vtanh.pop %v355
    %v364 = vrot.slane %v262, 6
    %v366 = vmul.f32 %v361, %v364
    %368 = vrot.lane.b32.xlu0 %v362, 32
    %v369 = vpop.permute.xlu0 %368
    %v371 = vmul.f32 %v361, %v369
    %373 = vrot.lane.b32.xlu0 %v371, 32
    %v374 = vpop.permute.xlu0 %373
    %v376 = vadd.f32 %v366, %v374
    %v377 = vtanh.pop %v376
    %379 = vrot.lane.b32.xlu0 %v377, 32
    %v380 = vpop.permute.xlu0 %379
    %v382 = vmul.f32 %v361, %v380
    %v383 = vpack.c.bf16 %v382, %v382
    %v385 = vrot.slane %v383, 1
    %386 = vrot.lane.b32.xlu0 %v385, 64
    %v387 = vpop.permute.xlu0 %386
    %v389 = vsel %vm102, %v387, 0
    %391 = vmatprep.subr.bf16.mxu0 0
    %392 = vmatpush1.bf16.msra.mxu0 %v305
    %393 = vmatprep.subr.bf16.mxu0 0
    %394 = vmatpush1.bf16.msra.mxu0 %v306
    %395 = vmatprep.subr.bf16.mxu0 0
    %396 = vmatpush1.bf16.msra.mxu0 0
    %397 = vmatprep.subr.bf16.mxu0 0
    %398 = vmatpush1.bf16.msra.mxu0 0
    %399 = vmatprep.subr.bf16.mxu0 0
    %400 = vmatpush1.bf16.msra.mxu0 0
    %401 = vmatprep.subr.bf16.mxu0 0
    %402 = vmatpush1.bf16.msra.mxu0 0
    %403 = vmatprep.subr.bf16.mxu0 0
    %404 = vmatpush1.bf16.msra.mxu0 0
    %405 = vmatprep.subr.bf16.mxu0 0
    %406 = vmatpush1.bf16.msra.mxu0 0
    %407 = vmatprep.subr.bf16.mxu0 0
    %408 = vmatpush1.bf16.msra.mxu0 0
    %409 = vmatprep.subr.bf16.mxu0 0
    %410 = vmatpush1.bf16.msra.mxu0 0
    %411 = vmatprep.subr.bf16.mxu0 0
    %412 = vmatpush1.bf16.msra.mxu0 0
    %413 = vmatprep.subr.bf16.mxu0 0
    %414 = vmatpush1.bf16.msra.mxu0 0
    %415 = vmatprep.subr.bf16.mxu0 0
    %416 = vmatpush1.bf16.msra.mxu0 0
    %417 = vmatprep.subr.bf16.mxu0 0
    %418 = vmatpush1.bf16.msra.mxu0 0
    %419 = vmatprep.subr.bf16.mxu0 0
    %420 = vmatpush1.bf16.msra.mxu0 0
    %421 = vmatprep.subr.bf16.mxu0 0
    %422 = vmatpush1.bf16.msra.mxu0 0
    %423 = vmatprep.mubr.bf16.mxu0 0
    %424 = vmatmul.mubr.bf16.gmra.mrb[0].mxu0 %v389
    %v425 = vpop.f32.mrb[0].mxu0
    %v426 = vadd.f32 0.0, %v425
    %v427 = vpop.f32.mrb[0].mxu0
    %v428 = vpop.f32.mrb[0].mxu0
    %v429 = vpop.f32.mrb[0].mxu0
    %430 = vdwg.mxu0
    %v432 = vrot.slane %v426, 4
    %v434 = vadd.f32 %v141, %v432
    %v435 = vxor.u32 %v434, 2147483648
    %v436 = vmul.f32 %v435, 1.442695
    %v437 = vpow.pop %v436
    %v438 = vadd.f32 %v437, 1.0
    %v439 = vrcp.pop %v438
    %v440 = vmul.f32 1.0, %v439
    %v441 = vtanh.pop %v434
    %v443 = vrot.slane %v376, 6
    %v445 = vmul.f32 %v440, %v443
    %447 = vrot.lane.b32.xlu0 %v441, 32
    %v448 = vpop.permute.xlu0 %447
    %v450 = vmul.f32 %v440, %v448
    %452 = vrot.lane.b32.xlu0 %v450, 32
    %v453 = vpop.permute.xlu0 %452
    %v455 = vadd.f32 %v445, %v453
    %v456 = vtanh.pop %v455
    %458 = vrot.lane.b32.xlu0 %v456, 32
    %v459 = vpop.permute.xlu0 %458
    %v461 = vmul.f32 %v440, %v459
    %v462 = vpack.c.bf16 %v461, %v461
    %v464 = vrot.slane %v462, 2
    %465 = vrot.lane.b32.xlu0 %v464, 64
    %v466 = vpop.permute.xlu0 %465
    %v468 = vsel %vm102, %v466, 0
    %470 = vmatprep.subr.bf16.mxu0 0
    %471 = vmatpush1.bf16.msra.mxu0 %v305
    %472 = vmatprep.subr.bf16.mxu0 0
    %473 = vmatpush1.bf16.msra.mxu0 %v306
    %474 = vmatprep.subr.bf16.mxu0 0
    %475 = vmatpush1.bf16.msra.mxu0 0
    %476 = vmatprep.subr.bf16.mxu0 0
    %477 = vmatpush1.bf16.msra.mxu0 0
    %478 = vmatprep.subr.bf16.mxu0 0
    %479 = vmatpush1.bf16.msra.mxu0 0
    %480 = vmatprep.subr.bf16.mxu0 0
    %481 = vmatpush1.bf16.msra.mxu0 0
    %482 = vmatprep.subr.bf16.mxu0 0
    %483 = vmatpush1.bf16.msra.mxu0 0
    %484 = vmatprep.subr.bf16.mxu0 0
    %485 = vmatpush1.bf16.msra.mxu0 0
    %486 = vmatprep.subr.bf16.mxu0 0
    %487 = vmatpush1.bf16.msra.mxu0 0
    %488 = vmatprep.subr.bf16.mxu0 0
    %489 = vmatpush1.bf16.msra.mxu0 0
    %490 = vmatprep.subr.bf16.mxu0 0
    %491 = vmatpush1.bf16.msra.mxu0 0
    %492 = vmatprep.subr.bf16.mxu0 0
    %493 = vmatpush1.bf16.msra.mxu0 0
    %494 = vmatprep.subr.bf16.mxu0 0
    %495 = vmatpush1.bf16.msra.mxu0 0
    %496 = vmatprep.subr.bf16.mxu0 0
    %497 = vmatpush1.bf16.msra.mxu0 0
    %498 = vmatprep.subr.bf16.mxu0 0
    %499 = vmatpush1.bf16.msra.mxu0 0
    %500 = vmatprep.subr.bf16.mxu0 0
    %501 = vmatpush1.bf16.msra.mxu0 0
    %502 = vmatprep.mubr.bf16.mxu0 0
    %503 = vmatmul.mubr.bf16.gmra.mrb[0].mxu0 %v468
    %v504 = vpop.f32.mrb[0].mxu0
    %v505 = vadd.f32 0.0, %v504
    %v506 = vpop.f32.mrb[0].mxu0
    %v507 = vpop.f32.mrb[0].mxu0
    %v508 = vpop.f32.mrb[0].mxu0
    %509 = vdwg.mxu0
    %v511 = vrot.slane %v505, 2
    %v513 = vadd.f32 %v141, %v511
    %v514 = vxor.u32 %v513, 2147483648
    %v515 = vmul.f32 %v514, 1.442695
    %v516 = vpow.pop %v515
    %v517 = vadd.f32 %v516, 1.0
    %v518 = vrcp.pop %v517
    %v519 = vmul.f32 1.0, %v518
    %v520 = vtanh.pop %v513
    %v522 = vrot.slane %v455, 6
    %v524 = vmul.f32 %v519, %v522
    %526 = vrot.lane.b32.xlu0 %v520, 32
    %v527 = vpop.permute.xlu0 %526
    %v529 = vmul.f32 %v519, %v527
    %531 = vrot.lane.b32.xlu0 %v529, 32
    %v532 = vpop.permute.xlu0 %531
    %v534 = vadd.f32 %v524, %v532
    %v535 = vtanh.pop %v534
    %537 = vrot.lane.b32.xlu0 %v535, 32
    %v538 = vpop.permute.xlu0 %537
    %v540 = vmul.f32 %v519, %v538
    %v541 = vpack.c.bf16 %v540, %v540
    %v543 = vrot.slane %v541, 3
    %544 = vrot.lane.b32.xlu0 %v543, 64
    %v545 = vpop.permute.xlu0 %544
    %v547 = vsel %vm102, %v545, 0
    %549 = vmatprep.subr.bf16.mxu0 0
    %550 = vmatpush1.bf16.msra.mxu0 %v305
    %551 = vmatprep.subr.bf16.mxu0 0
    %552 = vmatpush1.bf16.msra.mxu0 %v306
    %553 = vmatprep.subr.bf16.mxu0 0
    %554 = vmatpush1.bf16.msra.mxu0 0
    %555 = vmatprep.subr.bf16.mxu0 0
    %556 = vmatpush1.bf16.msra.mxu0 0
    %557 = vmatprep.subr.bf16.mxu0 0
    %558 = vmatpush1.bf16.msra.mxu0 0
    %559 = vmatprep.subr.bf16.mxu0 0
    %560 = vmatpush1.bf16.msra.mxu0 0
    %561 = vmatprep.subr.bf16.mxu0 0
    %562 = vmatpush1.bf16.msra.mxu0 0
    %563 = vmatprep.subr.bf16.mxu0 0
    %564 = vmatpush1.bf16.msra.mxu0 0
    %565 = vmatprep.subr.bf16.mxu0 0
    %566 = vmatpush1.bf16.msra.mxu0 0
    %567 = vmatprep.subr.bf16.mxu0 0
    %568 = vmatpush1.bf16.msra.mxu0 0
    %569 = vmatprep.subr.bf16.mxu0 0
    %570 = vmatpush1.bf16.msra.mxu0 0
    %571 = vmatprep.subr.bf16.mxu0 0
    %572 = vmatpush1.bf16.msra.mxu0 0
    %573 = vmatprep.subr.bf16.mxu0 0
    %574 = vmatpush1.bf16.msra.mxu0 0
    %575 = vmatprep.subr.bf16.mxu0 0
    %576 = vmatpush1.bf16.msra.mxu0 0
    %577 = vmatprep.subr.bf16.mxu0 0
    %578 = vmatpush1.bf16.msra.mxu0 0
    %579 = vmatprep.subr.bf16.mxu0 0
    %580 = vmatpush1.bf16.msra.mxu0 0
    %581 = vmatprep.mubr.bf16.mxu0 0
    %582 = vmatmul.mubr.bf16.gmra.mrb[0].mxu0 %v547
    %v583 = vpop.f32.mrb[0].mxu0
    %v584 = vadd.f32 0.0, %v583
    %v585 = vpop.f32.mrb[0].mxu0
    %v586 = vpop.f32.mrb[0].mxu0
    %v587 = vpop.f32.mrb[0].mxu0
    %588 = vdwg.mxu0
    %v589 = vadd.f32 %v144, %v584
    %v590 = vxor.u32 %v589, 2147483648
    %v591 = vmul.f32 %v590, 1.442695
    %v592 = vpow.pop %v591
    %v593 = vadd.f32 %v592, 1.0
    %v594 = vrcp.pop %v593
    %v595 = vmul.f32 1.0, %v594
    %v596 = vtanh.pop %v589
    %v598 = vrot.slane %v534, 6
    %v600 = vmul.f32 %v595, %v598
    %602 = vrot.lane.b32.xlu0 %v596, 32
    %v603 = vpop.permute.xlu0 %602
    %v605 = vmul.f32 %v595, %v603
    %607 = vrot.lane.b32.xlu0 %v605, 32
    %v608 = vpop.permute.xlu0 %607
    %v610 = vadd.f32 %v600, %v608
    %v611 = vtanh.pop %v610
    %613 = vrot.lane.b32.xlu0 %v611, 32
    %v614 = vpop.permute.xlu0 %613
    %v616 = vmul.f32 %v595, %v614
    %v617 = vpack.c.bf16 %v616, %v616
    %619 = vrot.lane.b32.xlu0 %v617, 64
    %v620 = vpop.permute.xlu0 %619
    %v622 = vsel %vm102, %v620, 0
    %624 = vmatprep.subr.bf16.mxu0 0
    %625 = vmatpush1.bf16.msra.mxu0 %v305
    %626 = vmatprep.subr.bf16.mxu0 0
    %627 = vmatpush1.bf16.msra.mxu0 %v306
    %628 = vmatprep.subr.bf16.mxu0 0
    %629 = vmatpush1.bf16.msra.mxu0 0
    %630 = vmatprep.subr.bf16.mxu0 0
    %631 = vmatpush1.bf16.msra.mxu0 0
    %632 = vmatprep.subr.bf16.mxu0 0
    %633 = vmatpush1.bf16.msra.mxu0 0
    %634 = vmatprep.subr.bf16.mxu0 0
    %635 = vmatpush1.bf16.msra.mxu0 0
    %636 = vmatprep.subr.bf16.mxu0 0
    %637 = vmatpush1.bf16.msra.mxu0 0
    %638 = vmatprep.subr.bf16.mxu0 0
    %639 = vmatpush1.bf16.msra.mxu0 0
    %640 = vmatprep.subr.bf16.mxu0 0
    %641 = vmatpush1.bf16.msra.mxu0 0
    %642 = vmatprep.subr.bf16.mxu0 0
    %643 = vmatpush1.bf16.msra.mxu0 0
    %644 = vmatprep.subr.bf16.mxu0 0
    %645 = vmatpush1.bf16.msra.mxu0 0
    %646 = vmatprep.subr.bf16.mxu0 0
    %647 = vmatpush1.bf16.msra.mxu0 0
    %648 = vmatprep.subr.bf16.mxu0 0
    %649 = vmatpush1.bf16.msra.mxu0 0
    %650 = vmatprep.subr.bf16.mxu0 0
    %651 = vmatpush1.bf16.msra.mxu0 0
    %652 = vmatprep.subr.bf16.mxu0 0
    %653 = vmatpush1.bf16.msra.mxu0 0
    %654 = vmatprep.subr.bf16.mxu0 0
    %655 = vmatpush1.bf16.msra.mxu0 0
    %656 = vmatprep.mubr.bf16.mxu0 0
    %657 = vmatmul.mubr.bf16.gmra.mrb[0].mxu0 %v622
    %v658 = vpop.f32.mrb[0].mxu0
    %v659 = vadd.f32 0.0, %v658
    %v660 = vpop.f32.mrb[0].mxu0
    %v661 = vpop.f32.mrb[0].mxu0
    %v662 = vpop.f32.mrb[0].mxu0
    %663 = vdwg.mxu0
    %v665 = vrot.slane %v659, 6
    %v667 = vadd.f32 %v144, %v665
    %v668 = vxor.u32 %v667, 2147483648
    %v669 = vmul.f32 %v668, 1.442695
    %v670 = vpow.pop %v669
    %v671 = vadd.f32 %v670, 1.0
    %v672 = vrcp.pop %v671
    %v673 = vmul.f32 1.0, %v672
    %v674 = vtanh.pop %v667
    %v676 = vrot.slane %v610, 6
    %v678 = vmul.f32 %v673, %v676
    %680 = vrot.lane.b32.xlu0 %v674, 32
    %v681 = vpop.permute.xlu0 %680
    %v683 = vmul.f32 %v673, %v681
    %685 = vrot.lane.b32.xlu0 %v683, 32
    %v686 = vpop.permute.xlu0 %685
    %v688 = vadd.f32 %v678, %v686
    %v689 = vtanh.pop %v688
    %691 = vrot.lane.b32.xlu0 %v689, 32
    %v692 = vpop.permute.xlu0 %691
    %v694 = vmul.f32 %v673, %v692
    %v695 = vpack.c.bf16 %v694, %v694
    %v697 = vrot.slane %v695, 1
    %698 = vrot.lane.b32.xlu0 %v697, 64
    %v699 = vpop.permute.xlu0 %698
    %v701 = vsel %vm102, %v699, 0
    %703 = vmatprep.subr.bf16.mxu0 0
    %704 = vmatpush1.bf16.msra.mxu0 %v305
    %705 = vmatprep.subr.bf16.mxu0 0
    %706 = vmatpush1.bf16.msra.mxu0 %v306
    %707 = vmatprep.subr.bf16.mxu0 0
    %708 = vmatpush1.bf16.msra.mxu0 0
    %709 = vmatprep.subr.bf16.mxu0 0
    %710 = vmatpush1.bf16.msra.mxu0 0
    %711 = vmatprep.subr.bf16.mxu0 0
    %712 = vmatpush1.bf16.msra.mxu0 0
    %713 = vmatprep.subr.bf16.mxu0 0
    %714 = vmatpush1.bf16.msra.mxu0 0
    %715 = vmatprep.subr.bf16.mxu0 0
    %716 = vmatpush1.bf16.msra.mxu0 0
    %717 = vmatprep.subr.bf16.mxu0 0
    %718 = vmatpush1.bf16.msra.mxu0 0
    %719 = vmatprep.subr.bf16.mxu0 0
    %720 = vmatpush1.bf16.msra.mxu0 0
    %721 = vmatprep.subr.bf16.mxu0 0
    %722 = vmatpush1.bf16.msra.mxu0 0
    %723 = vmatprep.subr.bf16.mxu0 0
    %724 = vmatpush1.bf16.msra.mxu0 0
    %725 = vmatprep.subr.bf16.mxu0 0
    %726 = vmatpush1.bf16.msra.mxu0 0
    %727 = vmatprep.subr.bf16.mxu0 0
    %728 = vmatpush1.bf16.msra.mxu0 0
    %729 = vmatprep.subr.bf16.mxu0 0
    %730 = vmatpush1.bf16.msra.mxu0 0
    %731 = vmatprep.subr.bf16.mxu0 0
    %732 = vmatpush1.bf16.msra.mxu0 0
    %733 = vmatprep.subr.bf16.mxu0 0
    %734 = vmatpush1.bf16.msra.mxu0 0
    %735 = vmatprep.mubr.bf16.mxu0 0
    %736 = vmatmul.mubr.bf16.gmra.mrb[0].mxu0 %v701
    %v737 = vpop.f32.mrb[0].mxu0
    %v738 = vadd.f32 0.0, %v737
    %v739 = vpop.f32.mrb[0].mxu0
    %v740 = vpop.f32.mrb[0].mxu0
    %v741 = vpop.f32.mrb[0].mxu0
    %742 = vdwg.mxu0
    %v744 = vrot.slane %v738, 4
    %v746 = vadd.f32 %v144, %v744
    %v747 = vxor.u32 %v746, 2147483648
    %v748 = vmul.f32 %v747, 1.442695
    %v749 = vpow.pop %v748
    %v750 = vadd.f32 %v749, 1.0
    %v751 = vrcp.pop %v750
    %v752 = vmul.f32 1.0, %v751
    %v753 = vtanh.pop %v746
    %v755 = vrot.slane %v688, 6
    %v757 = vmul.f32 %v752, %v755
    %759 = vrot.lane.b32.xlu0 %v753, 32
    %v760 = vpop.permute.xlu0 %759
    %v762 = vmul.f32 %v752, %v760
    %764 = vrot.lane.b32.xlu0 %v762, 32
    %v765 = vpop.permute.xlu0 %764
    %v767 = vadd.f32 %v757, %v765
    %v768 = vtanh.pop %v767
    %770 = vrot.lane.b32.xlu0 %v768, 32
    %v771 = vpop.permute.xlu0 %770
    %v773 = vmul.f32 %v752, %v771
    %v774 = vpack.c.bf16 %v773, %v773
    %v776 = vrot.slane %v774, 2
    %777 = vrot.lane.b32.xlu0 %v776, 64
    %v778 = vpop.permute.xlu0 %777
    %v780 = vsel %vm102, %v778, 0
    %782 = vmatprep.subr.bf16.mxu0 0
    %783 = vmatpush1.bf16.msra.mxu0 %v305
    %784 = vmatprep.subr.bf16.mxu0 0
    %785 = vmatpush1.bf16.msra.mxu0 %v306
    %786 = vmatprep.subr.bf16.mxu0 0
    %787 = vmatpush1.bf16.msra.mxu0 0
    %788 = vmatprep.subr.bf16.mxu0 0
    %789 = vmatpush1.bf16.msra.mxu0 0
    %790 = vmatprep.subr.bf16.mxu0 0
    %791 = vmatpush1.bf16.msra.mxu0 0
    %792 = vmatprep.subr.bf16.mxu0 0
    %793 = vmatpush1.bf16.msra.mxu0 0
    %794 = vmatprep.subr.bf16.mxu0 0
    %795 = vmatpush1.bf16.msra.mxu0 0
    %796 = vmatprep.subr.bf16.mxu0 0
    %797 = vmatpush1.bf16.msra.mxu0 0
    %798 = vmatprep.subr.bf16.mxu0 0
    %799 = vmatpush1.bf16.msra.mxu0 0
    %800 = vmatprep.subr.bf16.mxu0 0
    %801 = vmatpush1.bf16.msra.mxu0 0
    %802 = vmatprep.subr.bf16.mxu0 0
    %803 = vmatpush1.bf16.msra.mxu0 0
    %804 = vmatprep.subr.bf16.mxu0 0
    %805 = vmatpush1.bf16.msra.mxu0 0
    %806 = vmatprep.subr.bf16.mxu0 0
    %807 = vmatpush1.bf16.msra.mxu0 0
    %808 = vmatprep.subr.bf16.mxu0 0
    %809 = vmatpush1.bf16.msra.mxu0 0
    %810 = vmatprep.subr.bf16.mxu0 0
    %811 = vmatpush1.bf16.msra.mxu0 0
    %812 = vmatprep.subr.bf16.mxu0 0
    %813 = vmatpush1.bf16.msra.mxu0 0
    %814 = vmatprep.mubr.bf16.mxu0 0
    %815 = vmatmul.mubr.bf16.gmra.mrb[0].mxu0 %v780
    %v816 = vpop.f32.mrb[0].mxu0
    %v817 = vadd.f32 0.0, %v816
    %v818 = vpop.f32.mrb[0].mxu0
    %v819 = vpop.f32.mrb[0].mxu0
    %v820 = vpop.f32.mrb[0].mxu0
    %821 = vdwg.mxu0
    %v823 = vrot.slane %v817, 2
    %v825 = vadd.f32 %v144, %v823
    %v826 = vxor.u32 %v825, 2147483648
    %v827 = vmul.f32 %v826, 1.442695
    %v828 = vpow.pop %v827
    %v829 = vadd.f32 %v828, 1.0
    %v830 = vrcp.pop %v829
    %v831 = vmul.f32 1.0, %v830
    %v832 = vtanh.pop %v825
    %v834 = vrot.slane %v767, 6
    %v836 = vmul.f32 %v831, %v834
    %838 = vrot.lane.b32.xlu0 %v832, 32
    %v839 = vpop.permute.xlu0 %838
    %v841 = vmul.f32 %v831, %v839
    %843 = vrot.lane.b32.xlu0 %v841, 32
    %v844 = vpop.permute.xlu0 %843
    %v846 = vadd.f32 %v836, %v844
    %v847 = vtanh.pop %v846
    %849 = vrot.lane.b32.xlu0 %v847, 32
    %v850 = vpop.permute.xlu0 %849
    %v852 = vmul.f32 %v831, %v850
    %854 = vrot.lane.b32.xlu0 %v852, 64
    %v855 = vpop.permute.xlu0 %854
    %v858 = vrot.slane %v292, 2
    %859 = vrot.lane.b32.xlu0 %v858, 96
    %v860 = vpop.permute.xlu0 %859
    %v862 = vsel %vm102, %v855, %v860
    %v863 = vpack.c.bf16 %v862, %v862
    %v864 = vld [vmem:[#allocation4] sm:$0xff]
    %v865 = vld [vmem:[#allocation4 + $0x8] sm:$0xf]
    %v866 = vld [vmem:[#allocation4 + $0xc] sm:$0xff]
    %v867 = vld [vmem:[#allocation4 + $0x14] sm:$0xf]
    %v868 = vld [vmem:[#allocation4 + $0x18] sm:$0xff]
    %v869 = vld [vmem:[#allocation4 + $0x20] sm:$0xf]
    %v870 = vld [vmem:[#allocation4 + $0x24] sm:$0xff]
    %v871 = vld [vmem:[#allocation4 + $0x2c] sm:$0xf]
    %v872 = vld [vmem:[#allocation4 + $0x30] sm:$0xff]
    %v873 = vld [vmem:[#allocation4 + $0x38] sm:$0xf]
    %v874 = vld [vmem:[#allocation4 + $0x3c] sm:$0xff]
    %v875 = vld [vmem:[#allocation4 + $0x44] sm:$0xf]
    %v876 = vld [vmem:[#allocation4 + $0x48] sm:$0xff]
    %v877 = vld [vmem:[#allocation4 + $0x50] sm:$0xf]
    %v878 = vld [vmem:[#allocation4 + $0x54] sm:$0xff]
    %v879 = vld [vmem:[#allocation4 + $0x5c] sm:$0xf]
    %v880 = vld [vmem:[%s3] ss:$4 sm:$0x7]
    %v882 = vlaneseq
    %v883 = vshrl.u32 %v882, 7
    %v884 = vsub.s32 0, %v883
    %v885 = vrot.slane %v880, %v884
    %v886 = vlaneseq
    %v887 = vshrl.u32 %v886, 7
    %v888 = vsub.s32 1, %v887
    %v889 = vrot.slane %v880, %v888
    %v890 = vlaneseq
    %v891 = vshrl.u32 %v890, 7
    %v892 = vsub.s32 2, %v891
    %v893 = vrot.slane %v880, %v892
    %v898 = vrot.slane %v863, 3
    %v915 = vunpack.c.l.b16 %v864
    %v916 = vunpack.c.h.b16 %v864
    %v917 = vunpack.c.l.b16 %v865
    %v918 = vunpack.c.l.b16 %v866
    %v919 = vunpack.c.h.b16 %v866
    %v920 = vunpack.c.l.b16 %v867
    %v921 = vunpack.c.l.b16 %v868
    %v922 = vunpack.c.h.b16 %v868
    %v923 = vunpack.c.l.b16 %v869
    %v924 = vunpack.c.l.b16 %v870
    %v925 = vunpack.c.h.b16 %v870
    %v926 = vunpack.c.l.b16 %v871
    %v927 = vunpack.c.l.b16 %v872
    %v928 = vunpack.c.h.b16 %v872
    %v929 = vunpack.c.l.b16 %v873
    %v930 = vunpack.c.l.b16 %v874
    %v931 = vunpack.c.h.b16 %v874
    %v932 = vunpack.c.l.b16 %v875
    %v933 = vunpack.c.l.b16 %v876
    %v934 = vunpack.c.h.b16 %v876
    %v935 = vunpack.c.l.b16 %v877
    %v936 = vunpack.c.l.b16 %v878
    %v937 = vunpack.c.h.b16 %v878
    %v938 = vunpack.c.l.b16 %v879
    %v939 = vpack.c.b16 %v918, %v915
    %v940 = vpack.c.b16 %v919, %v916
    %v941 = vpack.c.b16 %v920, %v917
    %v942 = vpack.c.b16 %v924, %v921
    %v943 = vpack.c.b16 %v925, %v922
    %v944 = vpack.c.b16 %v926, %v923
    %v945 = vpack.c.b16 %v930, %v927
    %v946 = vpack.c.b16 %v931, %v928
    %v947 = vpack.c.b16 %v932, %v929
    %v948 = vpack.c.b16 %v936, %v933
    %v949 = vpack.c.b16 %v937, %v934
    %v950 = vpack.c.b16 %v938, %v935
    %v964 = vsel %vm194, %v898, 0
    %966 = vmatprep.subr.bf16.mxu0 %v940
    %967 = vmatpush1.bf16.msra.mxu0 %v939
    %968 = vmatprep.subr.bf16.mxu0 %v943
    %969 = vmatpush1.bf16.msra.mxu0 %v942
    %970 = vmatprep.subr.bf16.mxu0 %v946
    %971 = vmatpush1.bf16.msra.mxu0 %v945
    %972 = vmatprep.subr.bf16.mxu0 %v949
    %973 = vmatpush1.bf16.msra.mxu0 %v948
    %974 = vmatprep.subr.bf16.mxu0 0
    %975 = vmatpush1.bf16.msra.mxu0 0
    %976 = vmatprep.subr.bf16.mxu0 0
    %977 = vmatpush1.bf16.msra.mxu0 0
    %978 = vmatprep.subr.bf16.mxu0 0
    %979 = vmatpush1.bf16.msra.mxu0 0
    %980 = vmatprep.subr.bf16.mxu0 0
    %981 = vmatpush1.bf16.msra.mxu0 0
    %982 = vmatprep.subr.bf16.mxu0 0
    %983 = vmatpush1.bf16.msra.mxu0 0
    %984 = vmatprep.subr.bf16.mxu0 0
    %985 = vmatpush1.bf16.msra.mxu0 0
    %986 = vmatprep.subr.bf16.mxu0 0
    %987 = vmatpush1.bf16.msra.mxu0 0
    %988 = vmatprep.subr.bf16.mxu0 0
    %989 = vmatpush1.bf16.msra.mxu0 0
    %990 = vmatprep.subr.bf16.mxu0 0
    %991 = vmatpush1.bf16.msra.mxu0 0
    %992 = vmatprep.subr.bf16.mxu0 0
    %993 = vmatpush1.bf16.msra.mxu0 0
    %994 = vmatprep.subr.bf16.mxu0 0
    %995 = vmatpush1.bf16.msra.mxu0 0
    %996 = vmatprep.subr.bf16.mxu0 0
    %997 = vmatpush1.bf16.msra.mxu0 0
    %998 = vmatprep.mubr.bf16.mxu0 0
    %999 = vmatmul.mubr.bf16.gmra.mrb[0].mxu0 %v964
    %v1000 = vpop.f32.mrb[0].mxu0
    %v1001 = vadd.f32 %v885, %v1000
    %v1002 = vpop.f32.mrb[0].mxu0
    %v1003 = vadd.f32 %v889, %v1002
    %v1004 = vpop.f32.mrb[0].mxu0
    %v1005 = vpop.f32.mrb[0].mxu0
    %1006 = vdwg.mxu0
    %1007 = vmatprep.subr.bf16.mxu0 0
    %1008 = vmatpush1.bf16.msra.mxu0 %v941
    %1009 = vmatprep.subr.bf16.mxu0 0
    %1010 = vmatpush1.bf16.msra.mxu0 %v944
    %1011 = vmatprep.subr.bf16.mxu0 0
    %1012 = vmatpush1.bf16.msra.mxu0 %v947
    %1013 = vmatprep.subr.bf16.mxu0 0
    %1014 = vmatpush1.bf16.msra.mxu0 %v950
    %1015 = vmatprep.subr.bf16.mxu0 0
    %1016 = vmatpush1.bf16.msra.mxu0 0
    %1017 = vmatprep.subr.bf16.mxu0 0
    %1018 = vmatpush1.bf16.msra.mxu0 0
    %1019 = vmatprep.subr.bf16.mxu0 0
    %1020 = vmatpush1.bf16.msra.mxu0 0
    %1021 = vmatprep.subr.bf16.mxu0 0
    %1022 = vmatpush1.bf16.msra.mxu0 0
    %1023 = vmatprep.subr.bf16.mxu0 0
    %1024 = vmatpush1.bf16.msra.mxu0 0
    %1025 = vmatprep.subr.bf16.mxu0 0
    %1026 = vmatpush1.bf16.msra.mxu0 0
    %1027 = vmatprep.subr.bf16.mxu0 0
    %1028 = vmatpush1.bf16.msra.mxu0 0
    %1029 = vmatprep.subr.bf16.mxu0 0
    %1030 = vmatpush1.bf16.msra.mxu0 0
    %1031 = vmatprep.subr.bf16.mxu0 0
    %1032 = vmatpush1.bf16.msra.mxu0 0
    %1033 = vmatprep.subr.bf16.mxu0 0
    %1034 = vmatpush1.bf16.msra.mxu0 0
    %1035 = vmatprep.subr.bf16.mxu0 0
    %1036 = vmatpush1.bf16.msra.mxu0 0
    %1037 = vmatprep.subr.bf16.mxu0 0
    %1038 = vmatpush1.bf16.msra.mxu0 0
    %1039 = vmatprep.mubr.bf16.mxu0 0
    %1040 = vmatmul.mubr.bf16.gmra.mrb[0].mxu0 %v964
    %v1041 = vpop.f32.mrb[0].mxu0
    %v1042 = vadd.f32 %v893, %v1041
    %v1043 = vpop.f32.mrb[0].mxu0
    %v1044 = vpop.f32.mrb[0].mxu0
    %v1045 = vpop.f32.mrb[0].mxu0
    %1046 = vdwg.mxu0
    %v1047 = vmax.f32 %v1001, 0.0
    %v1048 = vmax.f32 %v1003, 0.0
    %v1049 = vmax.f32 %v1042, 0.0
    %s1050 = scalar_lea.vmem %s3, 1
    %v1051 = vld [vmem:[%s1050] ss:$4 sm:$0x7]
    %v1053 = vlaneseq
    %v1054 = vshrl.u32 %v1053, 7
    %v1055 = vsub.s32 0, %v1054
    %v1056 = vrot.slane %v1051, %v1055
    %v1057 = vlaneseq
    %v1058 = vshrl.u32 %v1057, 7
    %v1059 = vsub.s32 1, %v1058
    %v1060 = vrot.slane %v1051, %v1059
    %v1061 = vlaneseq
    %v1062 = vshrl.u32 %v1061, 7
    %v1063 = vsub.s32 2, %v1062
    %v1064 = vrot.slane %v1051, %v1063
    %v1068 = vmul.f32 %v1047, %v1056
    %v1069 = vmul.f32 %v1048, %v1060
    %v1070 = vmul.f32 %v1049, %v1064
    %vm1071 = vcmask 1041408
    %v1072 = vsel %vm1071, %v1068, 0.0
    %v1073 = vsel %vm1071, %v1069, 0.0
    %v1074 = vadd.f32 %v1072, %v1073
    %v1075 = vsel %vm1071, %v1070, 0.0
    %v1076 = vadd.f32 %v1074, %v1075
    %1077 = vadd.xlane.f32.xlu0 %v1076
    %v1078 = vpop.xlane.xlu0 %1077
    %v1079 = vld [vmem:[%s3 + $0x2] sm:$0x1]
    %v1080 = vlaneseq
    %v1081 = vshrl.u32 %v1080, 7
    %v1082 = vsub.s32 0, %v1081
    %v1083 = vrot.slane %v1079, %v1082
    %v1084 = vadd.f32 %v1078, %v1083
    %v1085 = vxor.u32 %v1084, 2147483648
    %v1086 = vmul.f32 %v1085, 1.442695
    %v1087 = vpow.pop %v1086
    %v1088 = vadd.f32 %v1087, 1.0
    %v1089 = vrcp.pop %v1088
    %v1090 = vmul.f32 1.0, %v1089
    %vm1091 = vcmask 1024
    %1092 = vst.msk [vmem:[%s5] sm:$0x3] %vm1091, %v1090
    // Predicated region
    $region30: #{model_forward.1} parent=1 // pred_check
      _
    $region31: #{model_forward.1} parent=1 // pred_check_branch
      %1094 = sbr.rel (0) target = $region33
    $region32: #{model_forward.1} parent=1 // pred_region
      _
    $region33: #{model_forward.1} parent=1 // pred_fallthru
      _
    // Predicated region
    $region34: #{model_forward.1} parent=1 // pred_check
      _
    $region35: #{model_forward.1} parent=1 // pred_check_branch
      %1096 = sbr.rel (0) target = $region37
    $region36: #{model_forward.1} parent=1 // pred_region
      _
    $region37: #{model_forward.1} parent=1 // pred_fallthru
      _
    %1097 = vsyncpa [#allocation3], 1
    %1098 = vsyncpa [#allocation5], 1

</llo_original>
